<compile_context>
chip_gen: v5e
topology: v5e:2x2
jax: 0.10.0
libtpu: 0.0.40
codegen_flags: <defaults>
</compile_context>

<pallas_src>
import jax
import jax.numpy as jnp
from jax.experimental import pallas as pl
from jax.experimental.pallas import tpu as pltpu

# Model / shape configuration (module defaults: expansion_factor=2, kernel=31,
# causal=False, dropout=0.0 -> identity).
DIM = 32
EXPANSION = 2
INNER = DIM * EXPANSION               # 64
KSIZE = 31
PAD_L = KSIZE // 2                    # 15
PAD_R = PAD_L - (KSIZE + 1) % 2       # 15  (calc_same_padding(31) == (15, 15))
B = 2
N = 16
BD = B * DIM                          # 64  : lanes of x / final output
BI = B * INNER                        # 128 : lanes of the GLU/depthwise stage
LN_EPS = 1e-5
BN_EPS = 1e-5

# Packed-parameter row layout (lane width = BI = 128).
ROW_W1O = 0                           # rows [0,64)    : conv1 "out" half, block-diag, LN folded
ROW_W1G = 64                          # rows [64,128)  : conv1 "gate" half, block-diag, LN folded
ROW_W2 = 128                          # rows [128,256) : conv2, block-diag (lanes [0,64) used)
ROW_DW = 256                          # rows [256,287) : 31 REVERSED depthwise taps (BN folded)
ROW_B1O = 287                         # conv1 bias, out half
ROW_B1G = 288                         # conv1 bias, gate half
ROW_DWB = 289                         # depthwise bias (BN folded)
ROW_B2 = 290                          # conv2 bias (lanes [0,64) used)
PACK_ROWS = 296                       # padded to a multiple of 8 sublanes


def conformer_conv_kernel(x_ref, wp_ref, o_ref):
    x = x_ref[...].astype(jnp.float32)                      # (N, B*DIM) = (16, 64)

    # --- LayerNorm over each batch's DIM channels (affine folded into conv1).
    # Batch lives in the lane axis, so stats are computed per 32-lane half.
    xa, xb = x[:, :DIM], x[:, DIM:]
    ma = jnp.mean(xa, axis=-1, keepdims=True)
    mb = jnp.mean(xb, axis=-1, keepdims=True)
    xca, xcb = xa - ma, xb - mb
    va = jnp.mean(xca * xca, axis=-1, keepdims=True)
    vb = jnp.mean(xcb * xcb, axis=-1, keepdims=True)
    xn = jnp.concatenate([xca * jax.lax.rsqrt(va + LN_EPS),
                          xcb * jax.lax.rsqrt(vb + LN_EPS)], axis=-1)   # (16, 64)

    # --- Pointwise Conv1d(dim -> 2*inner) + GLU, block-diagonal over batch ---
    h_out = jnp.dot(xn, wp_ref[ROW_W1O:ROW_W1O + BD, :],
                    preferred_element_type=jnp.float32) + wp_ref[ROW_B1O:ROW_B1O + 1, :]
    h_gate = jnp.dot(xn, wp_ref[ROW_W1G:ROW_W1G + BD, :],
                     preferred_element_type=jnp.float32) + wp_ref[ROW_B1G:ROW_B1G + 1, :]
    g = h_out * jax.nn.sigmoid(h_gate)                       # (16, 128)

    # --- Depthwise Conv1d ("same" padding), source-row form ---
    # KSIZE >= 2N-1, so every source row m contributes to every output row i
    # through the (always valid) tap k = m - i + PAD_L.  With the tap table
    # stored REVERSED, the contribution of row m is a contiguous 16-row window
    # of the table: y += g[m] * dw_rev[PAD_L - m : PAD_L - m + N].
    acc0 = jnp.zeros((N, BI), jnp.float32)
    acc1 = jnp.zeros((N, BI), jnp.float32)
    for m in range(N):
        win = wp_ref[ROW_DW + PAD_L - m:ROW_DW + PAD_L - m + N, :]   # (16, 128), static slice
        contrib = g[m:m + 1, :] * win                                 # sublane-broadcast FMA
        if m % 2 == 0:
            acc0 = acc0 + contrib
        else:
            acc1 = acc1 + contrib
    y = (acc0 + acc1) + wp_ref[ROW_DWB:ROW_DWB + 1, :]

    # --- Swish (eval-mode BatchNorm already folded into the depthwise conv) ---
    # TODO(synk): training-mode BatchNorm (batch statistics over B and N) is
    # not reproduced; eval-mode running-stats semantics are used instead.
    z = y * jax.nn.sigmoid(y)

    # --- Pointwise Conv1d(inner -> dim); Dropout(p=0.0) is the identity ---
    out = jnp.dot(z, wp_ref[ROW_W2:ROW_W2 + BI, :BD],
                  preferred_element_type=jnp.float32) + wp_ref[ROW_B2:ROW_B2 + 1, :BD]
    o_ref[...] = out.astype(o_ref.dtype)


def conformer_conv_module(x, params):
    """x: (B, N, DIM). params = (ln_g, ln_b, w1, b1, dw_w, dw_b, bn_scale,
    bn_shift, w2, b2), matching the PyTorch module (BatchNorm in eval form)."""
    ln_g, ln_b, w1, b1, dw_w, dw_b, bn_scale, bn_shift, w2, b2 = params
    b_, n_, d_ = x.shape
    assert (b_, n_, d_) == (B, N, DIM)
    # The source-row depthwise rewrite is only valid when every (out, src)
    # pair maps to an in-range tap.
    assert KSIZE >= 2 * N - 1
    f32 = jnp.float32

    # --- Host-side parameter algebra (done once, free at kernel time) ---
    gamma = ln_g.reshape(-1).astype(f32)
    beta = ln_b.reshape(-1).astype(f32)
    w1f = w1.astype(f32)
    b1f = b1.reshape(-1).astype(f32)
    w1o, w1g = w1f[:, :INNER], w1f[:, INNER:]
    b1o, b1g = b1f[:INNER], b1f[INNER:]
    w1o_f = gamma[:, None] * w1o                      # fold LN gamma
    w1g_f = gamma[:, None] * w1g
    b1o_f = beta @ w1o + b1o                          # fold LN beta
    b1g_f = beta @ w1g + b1g
    bs = bn_scale.reshape(-1).astype(f32)
    bsh = bn_shift.reshape(-1).astype(f32)
    dw_w_f = dw_w.astype(f32) * bs[None, :]           # fold BN scale
    dw_b_f = dw_b.reshape(-1).astype(f32) * bs + bsh  # fold BN shift
    dw_rev = dw_w_f[::-1, :]                          # reversed taps for source-row form
    w2f = w2.astype(f32)
    b2f = b2.reshape(-1).astype(f32)

    # Block-diagonal (batch-in-lanes) pointwise weights.
    w1o_bd = jnp.zeros((BD, BI), f32)
    w1g_bd = jnp.zeros((BD, BI), f32)
    w2_bd = jnp.zeros((BI, BD), f32)
    for bb in range(B):
        w1o_bd = w1o_bd.at[bb * DIM:(bb + 1) * DIM, bb * INNER:(bb + 1) * INNER].set(w1o_f)
        w1g_bd = w1g_bd.at[bb * DIM:(bb + 1) * DIM, bb * INNER:(bb + 1) * INNER].set(w1g_f)
        w2_bd = w2_bd.at[bb * INNER:(bb + 1) * INNER, bb * DIM:(bb + 1) * DIM].set(w2f)

    wpack = jnp.zeros((PACK_ROWS, BI), f32)
    wpack = wpack.at[ROW_W1O:ROW_W1O + BD, :].set(w1o_bd)
    wpack = wpack.at[ROW_W1G:ROW_W1G + BD, :].set(w1g_bd)
    wpack = wpack.at[ROW_W2:ROW_W2 + BI, :BD].set(w2_bd)
    wpack = wpack.at[ROW_DW:ROW_DW + KSIZE, :].set(jnp.tile(dw_rev, (1, B)))
    wpack = wpack.at[ROW_B1O, :].set(jnp.tile(b1o_f, B))
    wpack = wpack.at[ROW_B1G, :].set(jnp.tile(b1g_f, B))
    wpack = wpack.at[ROW_DWB, :].set(jnp.tile(dw_b_f, B))
    wpack = wpack.at[ROW_B2, :BD].set(jnp.tile(b2f, B))

    # Lane-dense relayout: batch goes into the lane axis -> (N, B*DIM).
    x2 = jnp.transpose(x, (1, 0, 2)).reshape(n_, BD)

    out = pl.pallas_call(
        conformer_conv_kernel,
        out_shape=jax.ShapeDtypeStruct((n_, BD), x.dtype),
        grid_spec=pltpu.PrefetchScalarGridSpec(
            num_scalar_prefetch=0,
            grid=(1,),
            in_specs=[
                pl.BlockSpec((n_, BD), lambda i: (0, 0)),             # x, batch-in-lanes
                pl.BlockSpec((PACK_ROWS, BI), lambda i: (0, 0)),      # all packed params
            ],
            out_specs=pl.BlockSpec((n_, BD), lambda i: (0, 0)),
        ),
        compiler_params=pltpu.CompilerParams(
            dimension_semantics=("arbitrary",)),
    )(x2, wpack)
    return jnp.transpose(out.reshape(n_, b_, d_), (1, 0, 2))


def reference_forward(x, params):
    """Pure-JAX reference with the unfolded parameters (PyTorch semantics)."""
    ln_g, ln_b, w1, b1, dw_w, dw_b, bn_scale, bn_shift, w2, b2 = params
    xf = x.astype(jnp.float32)
    mean = jnp.mean(xf, -1, keepdims=True)
    var = jnp.mean((xf - mean) ** 2, -1, keepdims=True)
    xn = (xf - mean) / jnp.sqrt(var + LN_EPS) * ln_g.reshape(-1) + ln_b.reshape(-1)
    h = xn @ w1 + b1.reshape(-1)
    g = h[..., :INNER] * jax.nn.sigmoid(h[..., INNER:])
    gp = jnp.pad(g, ((0, 0), (PAD_L, PAD_R), (0, 0)))
    y = sum(gp[:, k:k + N, :] * dw_w[k] for k in range(KSIZE)) + dw_b.reshape(-1)
    z = y * bn_scale.reshape(-1) + bn_shift.reshape(-1)
    z = z * jax.nn.sigmoid(z)
    out = z @ w2 + b2.reshape(-1)
    return out.astype(x.dtype)


if __name__ == "__main__":
    key = jax.random.PRNGKey(0)
    keys = jax.random.split(key, 12)

    x = jax.random.normal(keys[0], (B, N, DIM), jnp.float32)

    # Deterministic synthetic parameters (shapes match the PyTorch module).
    ln_g = jax.random.normal(keys[1], (1, DIM)) * 0.1 + 1.0
    ln_b = jax.random.normal(keys[2], (1, DIM)) * 0.1
    # nn.Conv1d(dim, 2*inner, 1): weight (2I, D, 1) -> stored here as (D, 2I).
    w1 = jax.random.normal(keys[3], (DIM, 2 * INNER)) * (1.0 / jnp.sqrt(DIM))
    b1 = jax.random.normal(keys[4], (1, 2 * INNER)) * 0.05
    # Depthwise conv weight (I, 1, K) -> stored as (K, I).
    dw_w = jax.random.normal(keys[5], (KSIZE, INNER)) * (1.0 / jnp.sqrt(KSIZE))
    dw_b = jax.random.normal(keys[6], (1, INNER)) * 0.05
    # BatchNorm1d params + running stats, folded into scale/shift (eval mode).
    bn_gamma = jax.random.normal(keys[7], (1, INNER)) * 0.1 + 1.0
    bn_beta = jax.random.normal(keys[8], (1, INNER)) * 0.1
    bn_mean = jax.random.normal(keys[9], (1, INNER)) * 0.1
    bn_var = jax.random.uniform(keys[10], (1, INNER), minval=0.5, maxval=1.5)
    bn_scale = bn_gamma / jnp.sqrt(bn_var + BN_EPS)
    bn_shift = bn_beta - bn_mean * bn_scale
    # nn.Conv1d(inner, dim, 1): weight (D, I, 1) -> stored here as (I, D).
    w2 = jax.random.normal(keys[11], (INNER, DIM)) * (1.0 / jnp.sqrt(INNER))
    b2 = jnp.zeros((1, DIM), jnp.float32)

    params = (ln_g, ln_b, w1, b1, dw_w, dw_b, bn_scale, bn_shift, w2, b2)

    out = conformer_conv_module(x, params)
    jax.block_until_ready(out)
    assert out.shape == (B, N, DIM) and out.dtype == jnp.float32

    ref = reference_forward(x, params)
    max_err = float(jnp.max(jnp.abs(out - ref)))
    assert jnp.allclose(out, ref, atol=2e-3, rtol=2e-3), f"max_err={max_err}"
    print("KERNEL_OK")
</pallas_src>

<mosaic_0001>
module attributes {stable_mosaic.version = 11 : i64} {
  func.func @conformer_conv_kernel(%arg0: i32, %arg1: memref<16x64xf32, #tpu.memory_space<vmem>>, %arg2: memref<296x128xf32, #tpu.memory_space<vmem>>, %arg3: memref<16x64xf32, #tpu.memory_space<vmem>>) attributes {dimension_semantics = [#tpu.dimension_semantics<arbitrary>], iteration_bounds = array<i64: 1>, scalar_prefetch = 0 : i64, scratch_operands = 0 : i64, tpu.core_type = #tpu.core_type<tc>, window_params = [{pipeline_mode = #tpu.pipeline_mode<synchronous>, transform_indices = @transform_0, window_bounds = array<i64: 16, 64>}, {pipeline_mode = #tpu.pipeline_mode<synchronous>, transform_indices = @transform_1, window_bounds = array<i64: 296, 128>}, {pipeline_mode = #tpu.pipeline_mode<synchronous>, transform_indices = @transform_2, window_bounds = array<i64: 16, 64>}]} {
    %c0 = arith.constant 0 : index
    %c0_0 = arith.constant 0 : index
    %0 = vector.load %arg1[%c0, %c0_0] : memref<16x64xf32, #tpu.memory_space<vmem>>, vector<16x64xf32>
    %1 = vector.extract_strided_slice %0 {offsets = [0, 0], sizes = [16, 32], strides = [1, 1]} : vector<16x64xf32> to vector<16x32xf32>
    %2 = vector.extract_strided_slice %0 {offsets = [0, 32], sizes = [16, 32], strides = [1, 1]} : vector<16x64xf32> to vector<16x32xf32>
    %cst = arith.constant dense<0.000000e+00> : vector<16xf32>
    %3 = vector.multi_reduction <add>, %1, %cst [1] : vector<16x32xf32> to vector<16xf32>
    %4 = vector.shape_cast %3 : vector<16xf32> to vector<16x1xf32>
    %cst_1 = arith.constant 3.200000e+01 : f32
    %5 = vector.broadcast %cst_1 : f32 to vector<16x1xf32>
    %6 = arith.divf %4, %5 : vector<16x1xf32>
    %cst_2 = arith.constant dense<0.000000e+00> : vector<16xf32>
    %7 = vector.multi_reduction <add>, %2, %cst_2 [1] : vector<16x32xf32> to vector<16xf32>
    %8 = vector.shape_cast %7 : vector<16xf32> to vector<16x1xf32>
    %cst_3 = arith.constant 3.200000e+01 : f32
    %9 = vector.broadcast %cst_3 : f32 to vector<16x1xf32>
    %10 = arith.divf %8, %9 : vector<16x1xf32>
    %11 = vector.broadcast %6 : vector<16x1xf32> to vector<16x32xf32>
    %12 = arith.subf %1, %11 : vector<16x32xf32>
    %13 = vector.broadcast %10 : vector<16x1xf32> to vector<16x32xf32>
    %14 = arith.subf %2, %13 : vector<16x32xf32>
    %15 = arith.mulf %12, %12 : vector<16x32xf32>
    %cst_4 = arith.constant dense<0.000000e+00> : vector<16xf32>
    %16 = vector.multi_reduction <add>, %15, %cst_4 [1] : vector<16x32xf32> to vector<16xf32>
    %17 = vector.shape_cast %16 : vector<16xf32> to vector<16x1xf32>
    %cst_5 = arith.constant 3.200000e+01 : f32
    %18 = vector.broadcast %cst_5 : f32 to vector<16x1xf32>
    %19 = arith.divf %17, %18 : vector<16x1xf32>
    %20 = arith.mulf %14, %14 : vector<16x32xf32>
    %cst_6 = arith.constant dense<0.000000e+00> : vector<16xf32>
    %21 = vector.multi_reduction <add>, %20, %cst_6 [1] : vector<16x32xf32> to vector<16xf32>
    %22 = vector.shape_cast %21 : vector<16xf32> to vector<16x1xf32>
    %cst_7 = arith.constant 3.200000e+01 : f32
    %23 = vector.broadcast %cst_7 : f32 to vector<16x1xf32>
    %24 = arith.divf %22, %23 : vector<16x1xf32>
    %cst_8 = arith.constant 9.99999974E-6 : f32
    %25 = vector.broadcast %cst_8 : f32 to vector<16x1xf32>
    %26 = arith.addf %19, %25 : vector<16x1xf32>
    %27 = math.rsqrt %26 : vector<16x1xf32>
    %28 = vector.broadcast %27 : vector<16x1xf32> to vector<16x32xf32>
    %29 = arith.mulf %12, %28 : vector<16x32xf32>
    %cst_9 = arith.constant 9.99999974E-6 : f32
    %30 = vector.broadcast %cst_9 : f32 to vector<16x1xf32>
    %31 = arith.addf %24, %30 : vector<16x1xf32>
    %32 = math.rsqrt %31 : vector<16x1xf32>
    %33 = vector.broadcast %32 : vector<16x1xf32> to vector<16x32xf32>
    %34 = arith.mulf %14, %33 : vector<16x32xf32>
    %35 = tpu.concatenate %29, %34 in 1 : vector<16x32xf32>, vector<16x32xf32> -> vector<16x64xf32>
    %c0_10 = arith.constant 0 : index
    %c0_11 = arith.constant 0 : index
    %36 = vector.load %arg2[%c0_10, %c0_11] : memref<296x128xf32, #tpu.memory_space<vmem>>, vector<64x128xf32>
    %cst_12 = arith.constant dense<0.000000e+00> : vector<16x128xf32>
    %37 = tpu.matmul %35, %36, %cst_12 {dimension_numbers = #tpu.dot_dimension_numbers<[1], [0], [0], [1], [0, 0, 1, 1], [], []>} : vector<16x64xf32>, vector<64x128xf32>, vector<16x128xf32> -> vector<16x128xf32>
    %c287 = arith.constant 287 : index
    %c0_13 = arith.constant 0 : index
    %38 = vector.load %arg2[%c287, %c0_13] : memref<296x128xf32, #tpu.memory_space<vmem>>, vector<1x128xf32>
    %39 = vector.broadcast %38 : vector<1x128xf32> to vector<16x128xf32>
    %40 = arith.addf %37, %39 : vector<16x128xf32>
    %c64 = arith.constant 64 : index
    %c0_14 = arith.constant 0 : index
    %41 = vector.load %arg2[%c64, %c0_14] : memref<296x128xf32, #tpu.memory_space<vmem>>, vector<64x128xf32>
    %cst_15 = arith.constant dense<0.000000e+00> : vector<16x128xf32>
    %42 = tpu.matmul %35, %41, %cst_15 {dimension_numbers = #tpu.dot_dimension_numbers<[1], [0], [0], [1], [0, 0, 1, 1], [], []>} : vector<16x64xf32>, vector<64x128xf32>, vector<16x128xf32> -> vector<16x128xf32>
    %c288 = arith.constant 288 : index
    %c0_16 = arith.constant 0 : index
    %43 = vector.load %arg2[%c288, %c0_16] : memref<296x128xf32, #tpu.memory_space<vmem>>, vector<1x128xf32>
    %44 = vector.broadcast %43 : vector<1x128xf32> to vector<16x128xf32>
    %45 = arith.addf %42, %44 : vector<16x128xf32>
    %46 = arith.negf %45 : vector<16x128xf32>
    %47 = math.exp %46 : vector<16x128xf32>
    %cst_17 = arith.constant 1.000000e+00 : f32
    %48 = vector.broadcast %cst_17 : f32 to vector<16x128xf32>
    %49 = arith.addf %48, %47 : vector<16x128xf32>
    %50 = arith.divf %48, %49 : vector<16x128xf32>
    %51 = arith.mulf %40, %50 : vector<16x128xf32>
    %cst_18 = arith.constant 0.000000e+00 : f32
    %52 = vector.broadcast %cst_18 : f32 to vector<16x128xf32>
    %cst_19 = arith.constant 0.000000e+00 : f32
    %53 = vector.broadcast %cst_19 : f32 to vector<16x128xf32>
    %c271 = arith.constant 271 : index
    %c0_20 = arith.constant 0 : index
    %54 = vector.load %arg2[%c271, %c0_20] : memref<296x128xf32, #tpu.memory_space<vmem>>, vector<16x128xf32>
    %55 = vector.extract_strided_slice %51 {offsets = [0, 0], sizes = [1, 128], strides = [1, 1]} : vector<16x128xf32> to vector<1x128xf32>
    %56 = vector.broadcast %55 : vector<1x128xf32> to vector<16x128xf32>
    %57 = arith.mulf %56, %54 : vector<16x128xf32>
    %58 = arith.addf %52, %57 : vector<16x128xf32>
    %c270 = arith.constant 270 : index
    %c0_21 = arith.constant 0 : index
    %59 = vector.load %arg2[%c270, %c0_21] : memref<296x128xf32, #tpu.memory_space<vmem>>, vector<16x128xf32>
    %60 = vector.extract_strided_slice %51 {offsets = [1, 0], sizes = [1, 128], strides = [1, 1]} : vector<16x128xf32> to vector<1x128xf32>
    %61 = vector.broadcast %60 : vector<1x128xf32> to vector<16x128xf32>
    %62 = arith.mulf %61, %59 : vector<16x128xf32>
    %63 = arith.addf %53, %62 : vector<16x128xf32>
    %c269 = arith.constant 269 : index
    %c0_22 = arith.constant 0 : index
    %64 = vector.load %arg2[%c269, %c0_22] : memref<296x128xf32, #tpu.memory_space<vmem>>, vector<16x128xf32>
    %65 = vector.extract_strided_slice %51 {offsets = [2, 0], sizes = [1, 128], strides = [1, 1]} : vector<16x128xf32> to vector<1x128xf32>
    %66 = vector.broadcast %65 : vector<1x128xf32> to vector<16x128xf32>
    %67 = arith.mulf %66, %64 : vector<16x128xf32>
    %68 = arith.addf %58, %67 : vector<16x128xf32>
    %c268 = arith.constant 268 : index
    %c0_23 = arith.constant 0 : index
    %69 = vector.load %arg2[%c268, %c0_23] : memref<296x128xf32, #tpu.memory_space<vmem>>, vector<16x128xf32>
    %70 = vector.extract_strided_slice %51 {offsets = [3, 0], sizes = [1, 128], strides = [1, 1]} : vector<16x128xf32> to vector<1x128xf32>
    %71 = vector.broadcast %70 : vector<1x128xf32> to vector<16x128xf32>
    %72 = arith.mulf %71, %69 : vector<16x128xf32>
    %73 = arith.addf %63, %72 : vector<16x128xf32>
    %c267 = arith.constant 267 : index
    %c0_24 = arith.constant 0 : index
    %74 = vector.load %arg2[%c267, %c0_24] : memref<296x128xf32, #tpu.memory_space<vmem>>, vector<16x128xf32>
    %75 = vector.extract_strided_slice %51 {offsets = [4, 0], sizes = [1, 128], strides = [1, 1]} : vector<16x128xf32> to vector<1x128xf32>
    %76 = vector.broadcast %75 : vector<1x128xf32> to vector<16x128xf32>
    %77 = arith.mulf %76, %74 : vector<16x128xf32>
    %78 = arith.addf %68, %77 : vector<16x128xf32>
    %c266 = arith.constant 266 : index
    %c0_25 = arith.constant 0 : index
    %79 = vector.load %arg2[%c266, %c0_25] : memref<296x128xf32, #tpu.memory_space<vmem>>, vector<16x128xf32>
    %80 = vector.extract_strided_slice %51 {offsets = [5, 0], sizes = [1, 128], strides = [1, 1]} : vector<16x128xf32> to vector<1x128xf32>
    %81 = vector.broadcast %80 : vector<1x128xf32> to vector<16x128xf32>
    %82 = arith.mulf %81, %79 : vector<16x128xf32>
    %83 = arith.addf %73, %82 : vector<16x128xf32>
    %c265 = arith.constant 265 : index
    %c0_26 = arith.constant 0 : index
    %84 = vector.load %arg2[%c265, %c0_26] : memref<296x128xf32, #tpu.memory_space<vmem>>, vector<16x128xf32>
    %85 = vector.extract_strided_slice %51 {offsets = [6, 0], sizes = [1, 128], strides = [1, 1]} : vector<16x128xf32> to vector<1x128xf32>
    %86 = vector.broadcast %85 : vector<1x128xf32> to vector<16x128xf32>
    %87 = arith.mulf %86, %84 : vector<16x128xf32>
    %88 = arith.addf %78, %87 : vector<16x128xf32>
    %c264 = arith.constant 264 : index
    %c0_27 = arith.constant 0 : index
    %89 = vector.load %arg2[%c264, %c0_27] : memref<296x128xf32, #tpu.memory_space<vmem>>, vector<16x128xf32>
    %90 = vector.extract_strided_slice %51 {offsets = [7, 0], sizes = [1, 128], strides = [1, 1]} : vector<16x128xf32> to vector<1x128xf32>
    %91 = vector.broadcast %90 : vector<1x128xf32> to vector<16x128xf32>
    %92 = arith.mulf %91, %89 : vector<16x128xf32>
    %93 = arith.addf %83, %92 : vector<16x128xf32>
    %c263 = arith.constant 263 : index
    %c0_28 = arith.constant 0 : index
    %94 = vector.load %arg2[%c263, %c0_28] : memref<296x128xf32, #tpu.memory_space<vmem>>, vector<16x128xf32>
    %95 = vector.extract_strided_slice %51 {offsets = [8, 0], sizes = [1, 128], strides = [1, 1]} : vector<16x128xf32> to vector<1x128xf32>
    %96 = vector.broadcast %95 : vector<1x128xf32> to vector<16x128xf32>
    %97 = arith.mulf %96, %94 : vector<16x128xf32>
    %98 = arith.addf %88, %97 : vector<16x128xf32>
    %c262 = arith.constant 262 : index
    %c0_29 = arith.constant 0 : index
    %99 = vector.load %arg2[%c262, %c0_29] : memref<296x128xf32, #tpu.memory_space<vmem>>, vector<16x128xf32>
    %100 = vector.extract_strided_slice %51 {offsets = [9, 0], sizes = [1, 128], strides = [1, 1]} : vector<16x128xf32> to vector<1x128xf32>
    %101 = vector.broadcast %100 : vector<1x128xf32> to vector<16x128xf32>
    %102 = arith.mulf %101, %99 : vector<16x128xf32>
    %103 = arith.addf %93, %102 : vector<16x128xf32>
    %c261 = arith.constant 261 : index
    %c0_30 = arith.constant 0 : index
    %104 = vector.load %arg2[%c261, %c0_30] : memref<296x128xf32, #tpu.memory_space<vmem>>, vector<16x128xf32>
    %105 = vector.extract_strided_slice %51 {offsets = [10, 0], sizes = [1, 128], strides = [1, 1]} : vector<16x128xf32> to vector<1x128xf32>
    %106 = vector.broadcast %105 : vector<1x128xf32> to vector<16x128xf32>
    %107 = arith.mulf %106, %104 : vector<16x128xf32>
    %108 = arith.addf %98, %107 : vector<16x128xf32>
    %c260 = arith.constant 260 : index
    %c0_31 = arith.constant 0 : index
    %109 = vector.load %arg2[%c260, %c0_31] : memref<296x128xf32, #tpu.memory_space<vmem>>, vector<16x128xf32>
    %110 = vector.extract_strided_slice %51 {offsets = [11, 0], sizes = [1, 128], strides = [1, 1]} : vector<16x128xf32> to vector<1x128xf32>
    %111 = vector.broadcast %110 : vector<1x128xf32> to vector<16x128xf32>
    %112 = arith.mulf %111, %109 : vector<16x128xf32>
    %113 = arith.addf %103, %112 : vector<16x128xf32>
    %c259 = arith.constant 259 : index
    %c0_32 = arith.constant 0 : index
    %114 = vector.load %arg2[%c259, %c0_32] : memref<296x128xf32, #tpu.memory_space<vmem>>, vector<16x128xf32>
    %115 = vector.extract_strided_slice %51 {offsets = [12, 0], sizes = [1, 128], strides = [1, 1]} : vector<16x128xf32> to vector<1x128xf32>
    %116 = vector.broadcast %115 : vector<1x128xf32> to vector<16x128xf32>
    %117 = arith.mulf %116, %114 : vector<16x128xf32>
    %118 = arith.addf %108, %117 : vector<16x128xf32>
    %c258 = arith.constant 258 : index
    %c0_33 = arith.constant 0 : index
    %119 = vector.load %arg2[%c258, %c0_33] : memref<296x128xf32, #tpu.memory_space<vmem>>, vector<16x128xf32>
    %120 = vector.extract_strided_slice %51 {offsets = [13, 0], sizes = [1, 128], strides = [1, 1]} : vector<16x128xf32> to vector<1x128xf32>
    %121 = vector.broadcast %120 : vector<1x128xf32> to vector<16x128xf32>
    %122 = arith.mulf %121, %119 : vector<16x128xf32>
    %123 = arith.addf %113, %122 : vector<16x128xf32>
    %c257 = arith.constant 257 : index
    %c0_34 = arith.constant 0 : index
    %124 = vector.load %arg2[%c257, %c0_34] : memref<296x128xf32, #tpu.memory_space<vmem>>, vector<16x128xf32>
    %125 = vector.extract_strided_slice %51 {offsets = [14, 0], sizes = [1, 128], strides = [1, 1]} : vector<16x128xf32> to vector<1x128xf32>
    %126 = vector.broadcast %125 : vector<1x128xf32> to vector<16x128xf32>
    %127 = arith.mulf %126, %124 : vector<16x128xf32>
    %128 = arith.addf %118, %127 : vector<16x128xf32>
    %c256 = arith.constant 256 : index
    %c0_35 = arith.constant 0 : index
    %129 = vector.load %arg2[%c256, %c0_35] : memref<296x128xf32, #tpu.memory_space<vmem>>, vector<16x128xf32>
    %130 = vector.extract_strided_slice %51 {offsets = [15, 0], sizes = [1, 128], strides = [1, 1]} : vector<16x128xf32> to vector<1x128xf32>
    %131 = vector.broadcast %130 : vector<1x128xf32> to vector<16x128xf32>
    %132 = arith.mulf %131, %129 : vector<16x128xf32>
    %133 = arith.addf %123, %132 : vector<16x128xf32>
    %134 = arith.addf %128, %133 : vector<16x128xf32>
    %c289 = arith.constant 289 : index
    %c0_36 = arith.constant 0 : index
    %135 = vector.load %arg2[%c289, %c0_36] : memref<296x128xf32, #tpu.memory_space<vmem>>, vector<1x128xf32>
    %136 = vector.broadcast %135 : vector<1x128xf32> to vector<16x128xf32>
    %137 = arith.addf %134, %136 : vector<16x128xf32>
    %138 = arith.negf %137 : vector<16x128xf32>
    %139 = math.exp %138 : vector<16x128xf32>
    %cst_37 = arith.constant 1.000000e+00 : f32
    %140 = vector.broadcast %cst_37 : f32 to vector<16x128xf32>
    %141 = arith.addf %140, %139 : vector<16x128xf32>
    %142 = arith.divf %140, %141 : vector<16x128xf32>
    %143 = arith.mulf %137, %142 : vector<16x128xf32>
    %c128 = arith.constant 128 : index
    %c0_38 = arith.constant 0 : index
    %144 = vector.load %arg2[%c128, %c0_38] : memref<296x128xf32, #tpu.memory_space<vmem>>, vector<128x64xf32>
    %cst_39 = arith.constant dense<0.000000e+00> : vector<16x64xf32>
    %145 = tpu.matmul %143, %144, %cst_39 {dimension_numbers = #tpu.dot_dimension_numbers<[1], [0], [0], [1], [0, 0, 1, 1], [], []>} : vector<16x128xf32>, vector<128x64xf32>, vector<16x64xf32> -> vector<16x64xf32>
    %c290 = arith.constant 290 : index
    %c0_40 = arith.constant 0 : index
    %146 = vector.load %arg2[%c290, %c0_40] : memref<296x128xf32, #tpu.memory_space<vmem>>, vector<1x64xf32>
    %147 = vector.broadcast %146 : vector<1x64xf32> to vector<16x64xf32>
    %148 = arith.addf %145, %147 : vector<16x64xf32>
    %c0_41 = arith.constant 0 : index
    %c0_42 = arith.constant 0 : index
    %149 = vector.load %arg3[%c0_41, %c0_42] : memref<16x64xf32, #tpu.memory_space<vmem>>, vector<16x64xf32>
    tpu.vector_store %arg3[%c0_41, %c0_42], %148 {strides = array<i32>} : memref<16x64xf32, #tpu.memory_space<vmem>>, vector<16x64xf32>,
    return
  }
  func.func @transform_0(%arg0: i32) -> (i32, i32) {
    %c0_i32 = arith.constant 0 : i32
    %c0_i32_0 = arith.constant 0 : i32
    %c0_i32_1 = arith.constant 0 : i32
    return %c0_i32, %c0_i32_0 : i32, i32
  }
  func.func @transform_1(%arg0: i32) -> (i32, i32) {
    %c0_i32 = arith.constant 0 : i32
    %c0_i32_0 = arith.constant 0 : i32
    %c0_i32_1 = arith.constant 0 : i32
    return %c0_i32, %c0_i32_0 : i32, i32
  }
  func.func @transform_2(%arg0: i32) -> (i32, i32) {
    %c0_i32 = arith.constant 0 : i32
    %c0_i32_0 = arith.constant 0 : i32
    %c0_i32_1 = arith.constant 0 : i32
    return %c0_i32, %c0_i32_0 : i32, i32
  }
}

</mosaic_0001>

<llo_original>
// kernel: tpu_custom_call.1
$region0: #{tpu_custom_call.1}
  #allocation0 [shape = 'u32[]', space=smem, size = 0x4, offset = 0x4, fixed_abs, tag = 'smem constant byte address 0x4 - core index']
  #allocation1 [shape = 'u32[72,128]{1,0:T(1,128)}', space=vmem, size = 0x9000, scoped, tag = 'internal scratch']
  %s0 = inlined_call_operand.hbm [shape: f32[16,64], index: 0, kind: input, shape index: {}]
  %s1 = inlined_call_operand.hbm [shape: f32[296,128], index: 1, kind: input, shape index: {}]
  %s2 = inlined_call_operand.hbm [shape: f32[16,64], index: 2, kind: output, shape index: {}]
  %s3 = sld [smem:[#allocation0]]
  $region26: #{tpu_custom_call.1} parent=0
    _
  %s5 = ssub.s32 1, %s3
  %s6 = scalar_select 0, %s5, %s3
  $region1: #{tpu_custom_call.1} parent=0
    #allocation2 [shape = 'u8[8192]{0}', space=vmem, size = 0x2000, scoped, tag = 'input window, operand 0, single buffered']
    #allocation3 [shape = 's32[1]{0}', space=sflag, size = 0x4, scoped, tag = 'scoped memory for tpu_custom_call.1']
    #allocation4 [shape = 's32[1]{0}', space=sflag, size = 0x4, scoped, tag = 'scoped memory for tpu_custom_call.1']
    #allocation5 [shape = 'u8[151552]{0}', space=vmem, size = 0x25000, scoped, tag = 'input window, operand 1, single buffered']
    #allocation6 [shape = 's32[1]{0}', space=sflag, size = 0x4, scoped, tag = 'scoped memory for tpu_custom_call.1']
    #allocation7 [shape = 'u8[8192]{0}', space=vmem, size = 0x2000, scoped, tag = 'output window, operand 0, single buffered']
    %7 = vsyncpa [#allocation3], 0
    %8 = vsyncpa [#allocation6], 0
    %9 = vsyncpa [#allocation4], 0
    // Predicated region
    $region2: #{tpu_custom_call.1} parent=1 // pred_check
      _
    $region3: #{tpu_custom_call.1} parent=1 // pred_check_branch
      %11 = sbr.rel (0) target = $region5
    $region4: #{tpu_custom_call.1} parent=1 // pred_region
      %13 = vsyncadd [#allocation3], 0
      %s14 = sshll.u32 %s0, 4
      %s15 = int_to_ptr.hbm [resolvable:$true] %s14
      %s16 = sshll.u32 [#allocation2], 4
      %s17 = int_to_ptr.vmem [resolvable:$true] %s16
      %22 = dma.hbm_to_vmem [thread:$0]  %s15, 256, %s17, [#allocation3], 128, 128, 8
    $region5: #{tpu_custom_call.1} parent=1 // pred_fallthru
      _
    // Predicated region
    $region6: #{tpu_custom_call.1} parent=1 // pred_check
      _
    $region7: #{tpu_custom_call.1} parent=1 // pred_check_branch
      %24 = sbr.rel (0) target = $region9
    $region8: #{tpu_custom_call.1} parent=1 // pred_region
      %26 = vsyncadd [#allocation6], 0
      %s27 = sshll.u32 %s1, 4
      %s28 = int_to_ptr.hbm [resolvable:$true] %s27
      %s29 = sshll.u32 [#allocation5], 4
      %s30 = int_to_ptr.vmem [resolvable:$true] %s29
      %35 = dma.hbm_to_vmem [thread:$0]  %s28, 4736, %s30, [#allocation6], 128, 128, 8
    $region9: #{tpu_custom_call.1} parent=1 // pred_fallthru
      _
    // Predicated region
    $region10: #{tpu_custom_call.1} parent=1 // pred_check
      _
    $region11: #{tpu_custom_call.1} parent=1 // pred_check_branch
      %37 = sbr.rel (0) target = $region13
    $region12: #{tpu_custom_call.1} parent=1 // pred_region
      %39 = dma.done [#allocation3], 256
    $region13: #{tpu_custom_call.1} parent=1 // pred_fallthru
      _
    // Predicated region
    $region14: #{tpu_custom_call.1} parent=1 // pred_check
      _
    $region15: #{tpu_custom_call.1} parent=1 // pred_check_branch
      %41 = sbr.rel (0) target = $region17
    $region16: #{tpu_custom_call.1} parent=1 // pred_region
      %43 = dma.done [#allocation6], 4736
    $region17: #{tpu_custom_call.1} parent=1 // pred_fallthru
      _
    %v44 = vld [vmem:[#allocation2] sm:$0xff]
    %v45 = vld [vmem:[#allocation2 + $0x8] sm:$0xff]
    %vm46 = vcmask 261120
    %v47 = vsel %vm46, %v44, 0.0
    %48 = vadd.xlane.f32.xlu0 %v47
    %v49 = vpop.xlane.xlu0 %48
    %v50 = vsel %vm46, %v45, 0.0
    %51 = vadd.xlane.f32.xlu0 %v50
    %v52 = vpop.xlane.xlu0 %51
    %v53 = vrcp.pop 32.0
    %v54 = vmul.f32 32.0, %v53
    %v55 = vsub.f32 1.0, %v54
    %v56 = vmul.f32 %v53, %v55
    %v57 = vadd.f32 %v53, %v56
    %vm58 = vweird.f32 %v53
    %v59 = vsel %vm58, %v53, %v57
    %v60 = vmul.f32 %v49, %v59
    %v61 = vmul.f32 %v52, %v59
    %64 = vrot.lane.b32.xlu0 %v44, 96
    %v65 = vpop.permute.xlu0 %64
    %66 = vrot.lane.b32.xlu0 %v45, 96
    %v67 = vpop.permute.xlu0 %66
    %v70 = vsel %vm46, %v65, 0.0
    %71 = vadd.xlane.f32.xlu0 %v70
    %v72 = vpop.xlane.xlu0 %71
    %v73 = vsel %vm46, %v67, 0.0
    %74 = vadd.xlane.f32.xlu0 %v73
    %v75 = vpop.xlane.xlu0 %74
    %v76 = vmul.f32 %v72, %v59
    %v77 = vmul.f32 %v75, %v59
    %v78 = vsub.f32 %v44, %v60
    %v79 = vsub.f32 %v45, %v61
    %v80 = vsub.f32 %v44, %v76
    %v81 = vsub.f32 %v45, %v77
    %v82 = vmul.f32 %v78, %v78
    %v83 = vmul.f32 %v79, %v79
    %v84 = vsel %vm46, %v82, 0.0
    %85 = vadd.xlane.f32.xlu0 %v84
    %v86 = vpop.xlane.xlu0 %85
    %v87 = vsel %vm46, %v83, 0.0
    %88 = vadd.xlane.f32.xlu0 %v87
    %v89 = vpop.xlane.xlu0 %88
    %v90 = vmul.f32 %v86, %v59
    %v91 = vmul.f32 %v89, %v59
    %v92 = vmul.f32 %v80, %v80
    %v93 = vmul.f32 %v81, %v81
    %96 = vrot.lane.b32.xlu0 %v92, 96
    %v97 = vpop.permute.xlu0 %96
    %98 = vrot.lane.b32.xlu0 %v93, 96
    %v99 = vpop.permute.xlu0 %98
    %v102 = vsel %vm46, %v97, 0.0
    %103 = vadd.xlane.f32.xlu0 %v102
    %v104 = vpop.xlane.xlu0 %103
    %v105 = vsel %vm46, %v99, 0.0
    %106 = vadd.xlane.f32.xlu0 %v105
    %v107 = vpop.xlane.xlu0 %106
    %v108 = vmul.f32 %v104, %v59
    %v109 = vmul.f32 %v107, %v59
    %v110 = vadd.f32 %v90, 1e-05
    %v111 = vadd.f32 %v91, 1e-05
    %v112 = vrsqrt.pop %v110
    %v113 = vmul.f32 %v112, %v110
    %v114 = vmul.f32 %v113, %v112
    %v115 = vmul.f32 0.5, %v114
    %v116 = vsub.f32 1.5, %v115
    %v117 = vmul.f32 %v112, %v116
    %vm118 = vweird.f32 %v110
    %vm119 = vweird.f32 %v112
    %vm120 = vmor %vm118, %vm119
    %v121 = vsel %vm120, %v112, %v117
    %v122 = vrsqrt.pop %v111
    %v123 = vmul.f32 %v122, %v111
    %v124 = vmul.f32 %v123, %v122
    %v125 = vmul.f32 0.5, %v124
    %v126 = vsub.f32 1.5, %v125
    %v127 = vmul.f32 %v122, %v126
    %vm128 = vweird.f32 %v111
    %vm129 = vweird.f32 %v122
    %vm130 = vmor %vm128, %vm129
    %v131 = vsel %vm130, %v122, %v127
    %v132 = vmul.f32 %v78, %v121
    %v133 = vmul.f32 %v79, %v131
    %v134 = vadd.f32 %v108, 1e-05
    %v135 = vadd.f32 %v109, 1e-05
    %v136 = vrsqrt.pop %v134
    %v137 = vmul.f32 %v136, %v134
    %v138 = vmul.f32 %v137, %v136
    %v139 = vmul.f32 0.5, %v138
    %v140 = vsub.f32 1.5, %v139
    %v141 = vmul.f32 %v136, %v140
    %vm142 = vweird.f32 %v134
    %vm143 = vweird.f32 %v136
    %vm144 = vmor %vm142, %vm143
    %v145 = vsel %vm144, %v136, %v141
    %v146 = vrsqrt.pop %v135
    %v147 = vmul.f32 %v146, %v135
    %v148 = vmul.f32 %v147, %v146
    %v149 = vmul.f32 0.5, %v148
    %v150 = vsub.f32 1.5, %v149
    %v151 = vmul.f32 %v146, %v150
    %vm152 = vweird.f32 %v135
    %vm153 = vweird.f32 %v146
    %vm154 = vmor %vm152, %vm153
    %v155 = vsel %vm154, %v146, %v151
    %v156 = vmul.f32 %v80, %v145
    %v157 = vmul.f32 %v81, %v155
    %v158 = vsel %vm46, %v132, %v156
    %v159 = vsel %vm46, %v133, %v157
    %v160 = vld [vmem:[#allocation5] sm:$0xff]
    %v161 = vld [vmem:[#allocation5 + $0x8] sm:$0xff]
    %v162 = vld [vmem:[#allocation5 + $0x10] sm:$0xff]
    %v163 = vld [vmem:[#allocation5 + $0x18] sm:$0xff]
    %v164 = vld [vmem:[#allocation5 + $0x20] sm:$0xff]
    %v165 = vld [vmem:[#allocation5 + $0x28] sm:$0xff]
    %v166 = vld [vmem:[#allocation5 + $0x30] sm:$0xff]
    %v167 = vld [vmem:[#allocation5 + $0x38] sm:$0xff]
    %v168 = vld [vmem:[#allocation5 + $0x11f] sm:$0x1]
    %v169 = vperm.slane %v168, 0
    %vm170 = vcmask 523264
    %v172 = vsel %vm170, %v158, 0
    %v175 = vsel %vm170, %v159, 0
    %177 = vmatpush.msra.mxu0 0.0
    %178 = vmatpush.msra.mxu0 0.0
    %179 = vmatpush.msra.mxu0 0.0
    %180 = vmatpush.msra.mxu0 0.0
    %181 = vmatpush.msra.mxu0 0.0
    %182 = vmatpush.msra.mxu0 0.0
    %183 = vmatpush.msra.mxu0 0.0
    %184 = vmatpush.msra.mxu0 0.0
    %185 = vmatpush.msra.mxu0 %v167
    %186 = vmatpush.msra.mxu0 %v166
    %187 = vmatpush.msra.mxu0 %v165
    %188 = vmatpush.msra.mxu0 %v164
    %189 = vmatpush.msra.mxu0 %v163
    %190 = vmatpush.msra.mxu0 %v162
    %191 = vmatpush.msra.mxu0 %v161
    %192 = vmatpush.msra.mxu0 %v160
    %193 = vmatmul.f32.gmra.mxu0 %v172
    %v194 = vpop.f32.mrf.mxu0
    %v195 = vadd.f32 %v169, %v194
    %196 = vmatmul.f32.gmra.mxu0 %v175
    %v197 = vpop.f32.mrf.mxu0
    %v198 = vadd.f32 %v169, %v197
    %199 = vdwg.mxu0
    %v200 = vld [vmem:[#allocation5 + $0x40] sm:$0xff]
    %v201 = vld [vmem:[#allocation5 + $0x48] sm:$0xff]
    %v202 = vld [vmem:[#allocation5 + $0x50] sm:$0xff]
    %v203 = vld [vmem:[#allocation5 + $0x58] sm:$0xff]
    %v204 = vld [vmem:[#allocation5 + $0x60] sm:$0xff]
    %v205 = vld [vmem:[#allocation5 + $0x68] sm:$0xff]
    %v206 = vld [vmem:[#allocation5 + $0x70] sm:$0xff]
    %v207 = vld [vmem:[#allocation5 + $0x78] sm:$0xff]
    %v208 = vld [vmem:[#allocation5 + $0x120] sm:$0x1]
    %v209 = vperm.slane %v208, 0
    %210 = vmatpush.msra.mxu0 0.0
    %211 = vmatpush.msra.mxu0 0.0
    %212 = vmatpush.msra.mxu0 0.0
    %213 = vmatpush.msra.mxu0 0.0
    %214 = vmatpush.msra.mxu0 0.0
    %215 = vmatpush.msra.mxu0 0.0
    %216 = vmatpush.msra.mxu0 0.0
    %217 = vmatpush.msra.mxu0 0.0
    %218 = vmatpush.msra.mxu0 %v207
    %219 = vmatpush.msra.mxu0 %v206
    %220 = vmatpush.msra.mxu0 %v205
    %221 = vmatpush.msra.mxu0 %v204
    %222 = vmatpush.msra.mxu0 %v203
    %223 = vmatpush.msra.mxu0 %v202
    %224 = vmatpush.msra.mxu0 %v201
    %225 = vmatpush.msra.mxu0 %v200
    %226 = vmatmul.f32.gmra.mxu0 %v172
    %v227 = vpop.f32.mrf.mxu0
    %v228 = vadd.f32 %v209, %v227
    %229 = vmatmul.f32.gmra.mxu0 %v175
    %v230 = vpop.f32.mrf.mxu0
    %v231 = vadd.f32 %v209, %v230
    %232 = vdwg.mxu0
    %v233 = vxor.u32 %v228, 2147483648
    %v234 = vxor.u32 %v231, 2147483648
    %v235 = vmul.f32 %v233, 1.442695
    %v236 = vpow.pop %v235
    %v237 = vmul.f32 %v234, 1.442695
    %v238 = vpow.pop %v237
    %v239 = vadd.f32 %v236, 1.0
    %v240 = vadd.f32 %v238, 1.0
    %v241 = vrcp.pop %v239
    %v242 = vmul.f32 %v239, %v241
    %v243 = vsub.f32 1.0, %v242
    %v244 = vmul.f32 %v241, %v243
    %v245 = vadd.f32 %v241, %v244
    %vm246 = vweird.f32 %v239
    %vm247 = vweird.f32 %v241
    %vm248 = vmor %vm246, %vm247
    %v249 = vsel %vm248, %v241, %v245
    %v250 = vand.u32 2147483647, %v239
    %vm251 = vcmp.eq.f32.partialorder %v250, 8.507059e+37
    %v252 = vand.u32 %v239, 2147483648
    %v253 = vor.u32 1.1754944e-38, %v252
    %v254 = vsel %vm251, %v253, %v249
    %v255 = vmul.f32 1.0, %v254
    %v256 = vrcp.pop %v240
    %v257 = vmul.f32 %v240, %v256
    %v258 = vsub.f32 1.0, %v257
    %v259 = vmul.f32 %v256, %v258
    %v260 = vadd.f32 %v256, %v259
    %vm261 = vweird.f32 %v240
    %vm262 = vweird.f32 %v256
    %vm263 = vmor %vm261, %vm262
    %v264 = vsel %vm263, %v256, %v260
    %v265 = vand.u32 2147483647, %v240
    %vm266 = vcmp.eq.f32.partialorder %v265, 8.507059e+37
    %v267 = vand.u32 %v240, 2147483648
    %v268 = vor.u32 1.1754944e-38, %v267
    %v269 = vsel %vm266, %v268, %v264
    %v270 = vmul.f32 1.0, %v269
    %v271 = vmul.f32 %v195, %v255
    %v272 = vmul.f32 %v198, %v270
    %v273 = vld [vmem:[#allocation5 + $0x10f] sm:$0xff]
    %v274 = vld [vmem:[#allocation5 + $0x117] sm:$0xff]
    %v275 = vperm.slane %v271, 0
    %v276 = vmul.f32 %v275, %v273
    %v277 = vmul.f32 %v275, %v274
    %v278 = vadd.f32 %v276, 0.0
    %v279 = vadd.f32 %v277, 0.0
    %v280 = vld [vmem:[#allocation5 + $0x10e] sm:$0xff]
    %v281 = vld [vmem:[#allocation5 + $0x116] sm:$0xff]
    %v282 = vperm.slane %v271, 1
    %v283 = vmul.f32 %v282, %v280
    %v284 = vmul.f32 %v282, %v281
    %v285 = vadd.f32 %v283, 0.0
    %v286 = vadd.f32 %v284, 0.0
    %v287 = vld [vmem:[#allocation5 + $0x10d] sm:$0xff]
    %v288 = vld [vmem:[#allocation5 + $0x115] sm:$0xff]
    %v289 = vperm.slane %v271, 2
    %v290 = vmul.f32 %v289, %v287
    %v291 = vmul.f32 %v289, %v288
    %v292 = vadd.f32 %v278, %v290
    %v293 = vadd.f32 %v279, %v291
    %v294 = vld [vmem:[#allocation5 + $0x10c] sm:$0xff]
    %v295 = vld [vmem:[#allocation5 + $0x114] sm:$0xff]
    %v296 = vperm.slane %v271, 3
    %v297 = vmul.f32 %v296, %v294
    %v298 = vmul.f32 %v296, %v295
    %v299 = vadd.f32 %v285, %v297
    %v300 = vadd.f32 %v286, %v298
    %v301 = vld [vmem:[#allocation5 + $0x10b] sm:$0xff]
    %v302 = vld [vmem:[#allocation5 + $0x113] sm:$0xff]
    %v303 = vperm.slane %v271, 4
    %v304 = vmul.f32 %v303, %v301
    %v305 = vmul.f32 %v303, %v302
    %v306 = vadd.f32 %v292, %v304
    %v307 = vadd.f32 %v293, %v305
    %v308 = vld [vmem:[#allocation5 + $0x10a] sm:$0xff]
    %v309 = vld [vmem:[#allocation5 + $0x112] sm:$0xff]
    %v310 = vperm.slane %v271, 5
    %v311 = vmul.f32 %v310, %v308
    %v312 = vmul.f32 %v310, %v309
    %v313 = vadd.f32 %v299, %v311
    %v314 = vadd.f32 %v300, %v312
    %v315 = vld [vmem:[#allocation5 + $0x109] sm:$0xff]
    %v316 = vld [vmem:[#allocation5 + $0x111] sm:$0xff]
    %v317 = vperm.slane %v271, 6
    %v318 = vmul.f32 %v317, %v315
    %v319 = vmul.f32 %v317, %v316
    %v320 = vadd.f32 %v306, %v318
    %v321 = vadd.f32 %v307, %v319
    %v322 = vld [vmem:[#allocation5 + $0x108] sm:$0xff]
    %v323 = vld [vmem:[#allocation5 + $0x110] sm:$0xff]
    %v324 = vperm.slane %v271, 7
    %v325 = vmul.f32 %v324, %v322
    %v326 = vmul.f32 %v324, %v323
    %v327 = vadd.f32 %v313, %v325
    %v328 = vadd.f32 %v314, %v326
    %v329 = vld [vmem:[#allocation5 + $0x107] sm:$0xff]
    %v330 = vperm.slane %v272, 0
    %v331 = vmul.f32 %v330, %v329
    %v332 = vmul.f32 %v330, %v273
    %v333 = vadd.f32 %v320, %v331
    %v334 = vadd.f32 %v321, %v332
    %v335 = vld [vmem:[#allocation5 + $0x106] sm:$0xff]
    %v336 = vperm.slane %v272, 1
    %v337 = vmul.f32 %v336, %v335
    %v338 = vmul.f32 %v336, %v280
    %v339 = vadd.f32 %v327, %v337
    %v340 = vadd.f32 %v328, %v338
    %v341 = vld [vmem:[#allocation5 + $0x105] sm:$0xff]
    %v342 = vperm.slane %v272, 2
    %v343 = vmul.f32 %v342, %v341
    %v344 = vmul.f32 %v342, %v287
    %v345 = vadd.f32 %v333, %v343
    %v346 = vadd.f32 %v334, %v344
    %v347 = vld [vmem:[#allocation5 + $0x104] sm:$0xff]
    %v348 = vperm.slane %v272, 3
    %v349 = vmul.f32 %v348, %v347
    %v350 = vmul.f32 %v348, %v294
    %v351 = vadd.f32 %v339, %v349
    %v352 = vadd.f32 %v340, %v350
    %v353 = vld [vmem:[#allocation5 + $0x103] sm:$0xff]
    %v354 = vperm.slane %v272, 4
    %v355 = vmul.f32 %v354, %v353
    %v356 = vmul.f32 %v354, %v301
    %v357 = vadd.f32 %v345, %v355
    %v358 = vadd.f32 %v346, %v356
    %v359 = vld [vmem:[#allocation5 + $0x102] sm:$0xff]
    %v360 = vperm.slane %v272, 5
    %v361 = vmul.f32 %v360, %v359
    %v362 = vmul.f32 %v360, %v308
    %v363 = vadd.f32 %v351, %v361
    %v364 = vadd.f32 %v352, %v362
    %v365 = vld [vmem:[#allocation5 + $0x101] sm:$0xff]
    %v366 = vperm.slane %v272, 6
    %v367 = vmul.f32 %v366, %v365
    %v368 = vmul.f32 %v366, %v315
    %v369 = vadd.f32 %v357, %v367
    %v370 = vadd.f32 %v358, %v368
    %v371 = vld [vmem:[#allocation5 + $0x100] sm:$0xff]
    %v372 = vperm.slane %v272, 7
    %v373 = vmul.f32 %v372, %v371
    %v374 = vmul.f32 %v372, %v322
    %v375 = vadd.f32 %v363, %v373
    %v376 = vadd.f32 %v364, %v374
    %v377 = vadd.f32 %v369, %v375
    %v378 = vadd.f32 %v370, %v376
    %v379 = vld [vmem:[#allocation5 + $0x121] sm:$0x1]
    %v380 = vperm.slane %v379, 0
    %v381 = vadd.f32 %v377, %v380
    %v382 = vadd.f32 %v378, %v380
    %v383 = vxor.u32 %v381, 2147483648
    %v384 = vxor.u32 %v382, 2147483648
    %v385 = vmul.f32 %v383, 1.442695
    %v386 = vpow.pop %v385
    %v387 = vmul.f32 %v384, 1.442695
    %v388 = vpow.pop %v387
    %v389 = vadd.f32 %v386, 1.0
    %v390 = vadd.f32 %v388, 1.0
    %v391 = vrcp.pop %v389
    %v392 = vmul.f32 %v389, %v391
    %v393 = vsub.f32 1.0, %v392
    %v394 = vmul.f32 %v391, %v393
    %v395 = vadd.f32 %v391, %v394
    %vm396 = vweird.f32 %v389
    %vm397 = vweird.f32 %v391
    %vm398 = vmor %vm396, %vm397
    %v399 = vsel %vm398, %v391, %v395
    %v400 = vand.u32 2147483647, %v389
    %vm401 = vcmp.eq.f32.partialorder %v400, 8.507059e+37
    %v402 = vand.u32 %v389, 2147483648
    %v403 = vor.u32 1.1754944e-38, %v402
    %v404 = vsel %vm401, %v403, %v399
    %v405 = vmul.f32 1.0, %v404
    %v406 = vrcp.pop %v390
    %v407 = vmul.f32 %v390, %v406
    %v408 = vsub.f32 1.0, %v407
    %v409 = vmul.f32 %v406, %v408
    %v410 = vadd.f32 %v406, %v409
    %vm411 = vweird.f32 %v390
    %vm412 = vweird.f32 %v406
    %vm413 = vmor %vm411, %vm412
    %v414 = vsel %vm413, %v406, %v410
    %v415 = vand.u32 2147483647, %v390
    %vm416 = vcmp.eq.f32.partialorder %v415, 8.507059e+37
    %v417 = vand.u32 %v390, 2147483648
    %v418 = vor.u32 1.1754944e-38, %v417
    %v419 = vsel %vm416, %v418, %v414
    %v420 = vmul.f32 1.0, %v419
    %v421 = vmul.f32 %v381, %v405
    %v422 = vmul.f32 %v382, %v420
    %v423 = vld [vmem:[#allocation5 + $0x80] sm:$0xff]
    %v424 = vld [vmem:[#allocation5 + $0x88] sm:$0xff]
    %v425 = vld [vmem:[#allocation5 + $0x90] sm:$0xff]
    %v426 = vld [vmem:[#allocation5 + $0x98] sm:$0xff]
    %v427 = vld [vmem:[#allocation5 + $0xa0] sm:$0xff]
    %v428 = vld [vmem:[#allocation5 + $0xa8] sm:$0xff]
    %v429 = vld [vmem:[#allocation5 + $0xb0] sm:$0xff]
    %v430 = vld [vmem:[#allocation5 + $0xb8] sm:$0xff]
    %v431 = vld [vmem:[#allocation5 + $0xc0] sm:$0xff]
    %v432 = vld [vmem:[#allocation5 + $0xc8] sm:$0xff]
    %v433 = vld [vmem:[#allocation5 + $0xd0] sm:$0xff]
    %v434 = vld [vmem:[#allocation5 + $0xd8] sm:$0xff]
    %v435 = vld [vmem:[#allocation5 + $0xe0] sm:$0xff]
    %v436 = vld [vmem:[#allocation5 + $0xe8] sm:$0xff]
    %v437 = vld [vmem:[#allocation5 + $0xf0] sm:$0xff]
    %v438 = vld [vmem:[#allocation5 + $0xf8] sm:$0xff]
    %v439 = vld [vmem:[#allocation5 + $0x122] sm:$0x1]
    %v440 = vperm.slane %v439, 0
    %441 = vmatpush.msra.mxu0 %v438
    %442 = vmatpush.msra.mxu0 %v437
    %443 = vmatpush.msra.mxu0 %v436
    %444 = vmatpush.msra.mxu0 %v435
    %445 = vmatpush.msra.mxu0 %v434
    %446 = vmatpush.msra.mxu0 %v433
    %447 = vmatpush.msra.mxu0 %v432
    %448 = vmatpush.msra.mxu0 %v431
    %449 = vmatpush.msra.mxu0 %v430
    %450 = vmatpush.msra.mxu0 %v429
    %451 = vmatpush.msra.mxu0 %v428
    %452 = vmatpush.msra.mxu0 %v427
    %453 = vmatpush.msra.mxu0 %v426
    %454 = vmatpush.msra.mxu0 %v425
    %455 = vmatpush.msra.mxu0 %v424
    %456 = vmatpush.msra.mxu0 %v423
    %457 = vmatmul.f32.gmra.mxu0 %v421
    %v458 = vpop.f32.mrf.mxu0
    %v459 = vadd.f32 %v440, %v458
    %460 = vmatmul.f32.gmra.mxu0 %v422
    %v461 = vpop.f32.mrf.mxu0
    %v462 = vadd.f32 %v440, %v461
    %463 = vdwg.mxu0
    %464 = vst.msk [vmem:[#allocation7] sm:$0xff] %vm170, %v459
    %465 = vst.msk [vmem:[#allocation7 + $0x8] sm:$0xff] %vm170, %v462
    // Predicated region
    $region18: #{tpu_custom_call.1} parent=1 // pred_check
      _
    $region19: #{tpu_custom_call.1} parent=1 // pred_check_branch
      %467 = sbr.rel (0) target = $region21
    $region20: #{tpu_custom_call.1} parent=1 // pred_region
      %469 = vsyncadd [#allocation4], 0
      %s470 = sshll.u32 [#allocation7], 4
      %s471 = int_to_ptr.vmem [resolvable:$true] %s470
      %s472 = sshll.u32 %s2, 4
      %s473 = int_to_ptr.hbm [resolvable:$true] %s472
      %478 = dma.vmem_to_hbm [thread:$0]  %s471, 256, %s473, [#allocation4], 128, 128, 8
    $region21: #{tpu_custom_call.1} parent=1 // pred_fallthru
      _
    // Predicated region
    $region22: #{tpu_custom_call.1} parent=1 // pred_check
      _
    $region23: #{tpu_custom_call.1} parent=1 // pred_check_branch
      %480 = sbr.rel (0) target = $region25
    $region24: #{tpu_custom_call.1} parent=1 // pred_region
      %482 = dma.done [#allocation4], 256
    $region25: #{tpu_custom_call.1} parent=1 // pred_fallthru
      _
    %483 = vsyncpa [#allocation3], 1
    %484 = vsyncpa [#allocation6], 1
    %485 = vsyncpa [#allocation4], 1

</llo_original>
